<compile_context>
chip_gen: v6e
topology: v6e:2x2x1
jax: 0.10.0
libtpu: 0.0.40
codegen_flags: <defaults>
</compile_context>

<pallas_src>
import jax
import jax.numpy as jnp
from jax.experimental import pallas as pl
from jax.experimental.pallas import tpu as pltpu


def _actor_kernel(x_ref, w1b1_ref, w2b2_ref, o_ref):
    TB, S = x_ref.shape          # (TILE_B, state_size)
    H = w1b1_ref.shape[1]        # hidden = 128
    # w1b1_ref: [S+1, H]  rows 0..S-1 = W1 (stored [in, out]), row S = b1
    # w2b2_ref: [H+1, A]  rows 0..H-1 = W2 (stored [in, out]), row H = b2

    x = x_ref[...]                                      # [TB, S] f32

    # ---- Layer 1: tiny contraction (K = S) -> unrolled broadcast FMAs on the VPU.
    acc = x[:, 0:1] * w1b1_ref[0:1, :]                  # [TB, H]
    for k in range(1, S):                               # static unroll, S is small
        acc = acc + x[:, k:k + 1] * w1b1_ref[k:k + 1, :]
    h = jnp.tanh(acc + w1b1_ref[S:S + 1, :])            # [TB, H], tanh on the EUP

    # ---- Layer 2: full K = H = 128 contraction -> MXU.
    logits = jnp.dot(h, w2b2_ref[:H, :], preferred_element_type=jnp.float32)
    logits = logits + w2b2_ref[H:H + 1, :]              # [TB, A]

    # ---- Softmax over actions (numerically stable).
    z = logits - jnp.max(logits, axis=-1, keepdims=True)
    e = jnp.exp(z)
    p = e * pl.reciprocal(jnp.sum(e, axis=-1, keepdims=True), approx=False)

    o_ref[...] = p.astype(o_ref.dtype)


def _pick_batch_tile(B: int, cap: int = 512) -> int:
    """Multiple-of-8 batch tile <= cap that minimizes padding waste."""
    n_tiles = pl.cdiv(B, cap)
    per_tile = pl.cdiv(B, n_tiles)
    return max(8, ((per_tile + 7) // 8) * 8)


def actor_forward(obs, w1, b1, w2, b2):
    """Fused Actor forward pi(a|s). obs: [B, S] f32 -> action probs [B, A] f32."""
    B, S = obs.shape
    H = w1.shape[1]
    A = w2.shape[1]

    # Pack weights + biases: 5 tiny operands -> 2 (fewer DMAs per call).
    w1b1 = jnp.concatenate([w1, b1], axis=0)            # [S+1, H]
    w2b2 = jnp.concatenate([w2, b2], axis=0)            # [H+1, A]

    tile_b = _pick_batch_tile(B)
    b_pad = pl.cdiv(B, tile_b) * tile_b
    obs_p = obs if b_pad == B else jnp.pad(obs, ((0, b_pad - B), (0, 0)))

    out = pl.pallas_call(
        _actor_kernel,
        out_shape=jax.ShapeDtypeStruct((b_pad, A), jnp.float32),
        grid_spec=pltpu.PrefetchScalarGridSpec(
            num_scalar_prefetch=0,
            grid=(b_pad // tile_b,),
            in_specs=[
                pl.BlockSpec((tile_b, S), lambda i: (i, 0)),
                # Constant index maps -> weights stay VMEM-resident across steps.
                pl.BlockSpec((S + 1, H), lambda i: (0, 0)),
                pl.BlockSpec((H + 1, A), lambda i: (0, 0)),
            ],
            out_specs=pl.BlockSpec((tile_b, A), lambda i: (i, 0)),
        ),
        compiler_params=pltpu.CompilerParams(
            dimension_semantics=("parallel",),   # lets v7x split the batch over 2 TCs
        ),
    )(obs_p, w1b1, w2b2)
    return out[:B]


def init_actor_params(key, state_size=4, hidden=128, action_size=5):
    """Deterministic init mimicking PyTorch nn.Linear default U(-1/sqrt(fan_in), +)."""
    k1, k2, k3, k4 = jax.random.split(key, 4)
    bound1 = 1.0 / jnp.sqrt(jnp.float32(state_size))
    bound2 = 1.0 / jnp.sqrt(jnp.float32(hidden))
    # Stored as [in, out] (transposed vs. PyTorch's [out, in]).
    w1 = jax.random.uniform(k1, (state_size, hidden), jnp.float32, -bound1, bound1)
    b1 = jax.random.uniform(k2, (1, hidden), jnp.float32, -bound1, bound1)
    w2 = jax.random.uniform(k3, (hidden, action_size), jnp.float32, -bound2, bound2)
    b2 = jax.random.uniform(k4, (1, action_size), jnp.float32, -bound2, bound2)
    return w1, b1, w2, b2


def _reference(obs, w1, b1, w2, b2):
    h = jnp.tanh(obs @ w1 + b1)
    return jax.nn.softmax(h @ w2 + b2, axis=-1)


if __name__ == "__main__":
    key = jax.random.PRNGKey(0)
    k_obs, k_obs2, k_params = jax.random.split(key, 3)

    state_size, action_size, hidden = 4, 5, 128
    w1, b1, w2, b2 = init_actor_params(k_params, state_size, hidden, action_size)

    # Small batch (typical single-env PPO step); not a multiple of 8 -> padding path.
    batch = 2
    obs = jax.random.normal(k_obs, (batch, state_size), jnp.float32)
    out = jax.block_until_ready(actor_forward(obs, w1, b1, w2, b2))
    ref = _reference(obs, w1, b1, w2, b2)
    assert out.shape == (batch, action_size)
    assert jnp.allclose(out, ref, atol=1e-5, rtol=1e-5)
    assert jnp.allclose(jnp.sum(out, axis=-1), jnp.ones((batch,)), atol=1e-5)

    # Larger, non-tile-aligned batch: exercises the multi-step batch grid.
    batch2 = 600
    obs2 = jax.random.normal(k_obs2, (batch2, state_size), jnp.float32)
    out2 = jax.block_until_ready(actor_forward(obs2, w1, b1, w2, b2))
    ref2 = _reference(obs2, w1, b1, w2, b2)
    assert out2.shape == (batch2, action_size)
    assert jnp.allclose(out2, ref2, atol=1e-5, rtol=1e-5)

    print("KERNEL_OK")
</pallas_src>

<mosaic_0001>
module attributes {stable_mosaic.version = 11 : i64} {
  func.func @_actor_kernel(%arg0: i32, %arg1: memref<8x4xf32, #tpu.memory_space<vmem>>, %arg2: memref<5x128xf32, #tpu.memory_space<vmem>>, %arg3: memref<129x5xf32, #tpu.memory_space<vmem>>, %arg4: memref<8x5xf32, #tpu.memory_space<vmem>>) attributes {dimension_semantics = [#tpu.dimension_semantics<parallel>], iteration_bounds = array<i64: 1>, scalar_prefetch = 0 : i64, scratch_operands = 0 : i64, tpu.core_type = #tpu.core_type<tc>, window_params = [{transform_indices = @transform_0, window_bounds = array<i64: 8, 4>}, {pipeline_mode = #tpu.pipeline_mode<synchronous>, transform_indices = @transform_1, window_bounds = array<i64: 5, 128>}, {pipeline_mode = #tpu.pipeline_mode<synchronous>, transform_indices = @transform_2, window_bounds = array<i64: 129, 5>}, {transform_indices = @transform_3, window_bounds = array<i64: 8, 5>}]} {
    %c0 = arith.constant 0 : index
    %c0_0 = arith.constant 0 : index
    %0 = vector.load %arg1[%c0, %c0_0] : memref<8x4xf32, #tpu.memory_space<vmem>>, vector<8x4xf32>
    %1 = vector.extract_strided_slice %0 {offsets = [0, 0], sizes = [8, 1], strides = [1, 1]} : vector<8x4xf32> to vector<8x1xf32>
    %c0_1 = arith.constant 0 : index
    %c0_2 = arith.constant 0 : index
    %2 = vector.load %arg2[%c0_1, %c0_2] : memref<5x128xf32, #tpu.memory_space<vmem>>, vector<1x128xf32>
    %3 = vector.broadcast %1 : vector<8x1xf32> to vector<8x128xf32>
    %4 = vector.broadcast %2 : vector<1x128xf32> to vector<8x128xf32>
    %5 = arith.mulf %3, %4 : vector<8x128xf32>
    %6 = vector.extract_strided_slice %0 {offsets = [0, 1], sizes = [8, 1], strides = [1, 1]} : vector<8x4xf32> to vector<8x1xf32>
    %c1 = arith.constant 1 : index
    %c0_3 = arith.constant 0 : index
    %7 = vector.load %arg2[%c1, %c0_3] : memref<5x128xf32, #tpu.memory_space<vmem>>, vector<1x128xf32>
    %8 = vector.broadcast %6 : vector<8x1xf32> to vector<8x128xf32>
    %9 = vector.broadcast %7 : vector<1x128xf32> to vector<8x128xf32>
    %10 = arith.mulf %8, %9 : vector<8x128xf32>
    %11 = arith.addf %5, %10 : vector<8x128xf32>
    %12 = vector.extract_strided_slice %0 {offsets = [0, 2], sizes = [8, 1], strides = [1, 1]} : vector<8x4xf32> to vector<8x1xf32>
    %c2 = arith.constant 2 : index
    %c0_4 = arith.constant 0 : index
    %13 = vector.load %arg2[%c2, %c0_4] : memref<5x128xf32, #tpu.memory_space<vmem>>, vector<1x128xf32>
    %14 = vector.broadcast %12 : vector<8x1xf32> to vector<8x128xf32>
    %15 = vector.broadcast %13 : vector<1x128xf32> to vector<8x128xf32>
    %16 = arith.mulf %14, %15 : vector<8x128xf32>
    %17 = arith.addf %11, %16 : vector<8x128xf32>
    %18 = vector.extract_strided_slice %0 {offsets = [0, 3], sizes = [8, 1], strides = [1, 1]} : vector<8x4xf32> to vector<8x1xf32>
    %c3 = arith.constant 3 : index
    %c0_5 = arith.constant 0 : index
    %19 = vector.load %arg2[%c3, %c0_5] : memref<5x128xf32, #tpu.memory_space<vmem>>, vector<1x128xf32>
    %20 = vector.broadcast %18 : vector<8x1xf32> to vector<8x128xf32>
    %21 = vector.broadcast %19 : vector<1x128xf32> to vector<8x128xf32>
    %22 = arith.mulf %20, %21 : vector<8x128xf32>
    %23 = arith.addf %17, %22 : vector<8x128xf32>
    %c4 = arith.constant 4 : index
    %c0_6 = arith.constant 0 : index
    %24 = vector.load %arg2[%c4, %c0_6] : memref<5x128xf32, #tpu.memory_space<vmem>>, vector<1x128xf32>
    %25 = vector.broadcast %24 : vector<1x128xf32> to vector<8x128xf32>
    %26 = arith.addf %23, %25 : vector<8x128xf32>
    %27 = math.tanh %26 : vector<8x128xf32>
    %c0_7 = arith.constant 0 : index
    %c0_8 = arith.constant 0 : index
    %28 = vector.load %arg3[%c0_7, %c0_8] : memref<129x5xf32, #tpu.memory_space<vmem>>, vector<128x5xf32>
    %cst = arith.constant dense<0.000000e+00> : vector<8x5xf32>
    %29 = tpu.matmul %27, %28, %cst {dimension_numbers = #tpu.dot_dimension_numbers<[1], [0], [0], [1], [0, 0, 1, 1], [], []>} : vector<8x128xf32>, vector<128x5xf32>, vector<8x5xf32> -> vector<8x5xf32>
    %c128 = arith.constant 128 : index
    %c0_9 = arith.constant 0 : index
    %30 = vector.load %arg3[%c128, %c0_9] : memref<129x5xf32, #tpu.memory_space<vmem>>, vector<1x5xf32>
    %31 = vector.broadcast %30 : vector<1x5xf32> to vector<8x5xf32>
    %32 = arith.addf %29, %31 : vector<8x5xf32>
    %cst_10 = arith.constant dense<0xFF800000> : vector<8xf32>
    %33 = vector.multi_reduction <maximumf>, %32, %cst_10 [1] : vector<8x5xf32> to vector<8xf32>
    %34 = vector.shape_cast %33 : vector<8xf32> to vector<8x1xf32>
    %35 = vector.broadcast %34 : vector<8x1xf32> to vector<8x5xf32>
    %36 = arith.subf %32, %35 : vector<8x5xf32>
    %37 = math.exp %36 : vector<8x5xf32>
    %cst_11 = arith.constant dense<0.000000e+00> : vector<8xf32>
    %38 = vector.multi_reduction <add>, %37, %cst_11 [1] : vector<8x5xf32> to vector<8xf32>
    %39 = vector.shape_cast %38 : vector<8xf32> to vector<8x1xf32>
    %40 = tpu.reciprocal %39 : vector<8x1xf32> -> vector<8x1xf32>
    %41 = vector.broadcast %40 : vector<8x1xf32> to vector<8x5xf32>
    %42 = arith.mulf %37, %41 : vector<8x5xf32>
    %c0_12 = arith.constant 0 : index
    %c0_13 = arith.constant 0 : index
    %43 = vector.load %arg4[%c0_12, %c0_13] : memref<8x5xf32, #tpu.memory_space<vmem>>, vector<8x5xf32>
    tpu.vector_store %arg4[%c0_12, %c0_13], %42 {strides = array<i32>} : memref<8x5xf32, #tpu.memory_space<vmem>>, vector<8x5xf32>,
    return
  }
  func.func @transform_0(%arg0: i32) -> (i32, i32) {
    %c0_i32 = arith.constant 0 : i32
    %c0_i32_0 = arith.constant 0 : i32
    return %arg0, %c0_i32 : i32, i32
  }
  func.func @transform_1(%arg0: i32) -> (i32, i32) {
    %c0_i32 = arith.constant 0 : i32
    %c0_i32_0 = arith.constant 0 : i32
    %c0_i32_1 = arith.constant 0 : i32
    return %c0_i32, %c0_i32_0 : i32, i32
  }
  func.func @transform_2(%arg0: i32) -> (i32, i32) {
    %c0_i32 = arith.constant 0 : i32
    %c0_i32_0 = arith.constant 0 : i32
    %c0_i32_1 = arith.constant 0 : i32
    return %c0_i32, %c0_i32_0 : i32, i32
  }
  func.func @transform_3(%arg0: i32) -> (i32, i32) {
    %c0_i32 = arith.constant 0 : i32
    %c0_i32_0 = arith.constant 0 : i32
    return %arg0, %c0_i32 : i32, i32
  }
}

</mosaic_0001>

<llo_original>
// kernel: tpu_custom_call.1
$region0: #{tpu_custom_call.1}
  #allocation0 [shape = 'u32[]', space=smem, size = 0x4, offset = 0x4, fixed_abs, tag = 'smem constant byte address 0x4 - core index']
  #allocation1 [shape = 'u32[144,128]{1,0:T(1,128)}', space=vmem, size = 0x12000, scoped, tag = 'internal scratch']
  %s0 = inlined_call_operand.vmem [shape: f32[8,4], index: 0, kind: input, shape index: {}]
  %s1 = inlined_call_operand.vmem [shape: f32[5,128], index: 1, kind: input, shape index: {}]
  %s2 = inlined_call_operand.vmem [shape: f32[129,5], index: 2, kind: input, shape index: {}]
  %s3 = inlined_call_operand.hbm [shape: f32[8,5], index: 3, kind: output, shape index: {}]
  %s4 = sld [smem:[#allocation0]]
  $region22: #{tpu_custom_call.1} parent=0
    _
  %s6 = ssub.s32 1, %s4
  %s7 = scalar_select 0, %s6, %s4
  $region1: #{tpu_custom_call.1} parent=0
    #allocation2 [shape = 'u8[4096]{0}', space=vmem, size = 0x1000, scoped, tag = 'output window, operand 0, single buffered']
    #allocation3 [shape = 's32[1]{0}', space=sflag, size = 0x4, scoped, tag = 'scoped memory for tpu_custom_call.1']
    %8 = vsyncpa [#allocation3], 0
    // Predicated region
    $region2: #{tpu_custom_call.1} parent=1 // pred_check
      _
    $region3: #{tpu_custom_call.1} parent=1 // pred_check_branch
      %10 = sbr.rel (0) target = $region5
    $region4: #{tpu_custom_call.1} parent=1 // pred_region
      _
    $region5: #{tpu_custom_call.1} parent=1 // pred_fallthru
      _
    // Predicated region
    $region6: #{tpu_custom_call.1} parent=1 // pred_check
      _
    $region7: #{tpu_custom_call.1} parent=1 // pred_check_branch
      %12 = sbr.rel (0) target = $region9
    $region8: #{tpu_custom_call.1} parent=1 // pred_region
      _
    $region9: #{tpu_custom_call.1} parent=1 // pred_fallthru
      _
    // Predicated region
    $region10: #{tpu_custom_call.1} parent=1 // pred_check
      _
    $region11: #{tpu_custom_call.1} parent=1 // pred_check_branch
      %14 = sbr.rel (0) target = $region13
    $region12: #{tpu_custom_call.1} parent=1 // pred_region
      _
    $region13: #{tpu_custom_call.1} parent=1 // pred_fallthru
      _
    %v15 = vld [vmem:[%s0] sm:$0xff]
    %v16 = vld [vmem:[%s1] sm:$0x1]
    %18 = vset.pattern.permute.xlu0 0
    %19 = vperm.xlu0 %18, %v15
    %v20 = vpop.permute.xlu0 %19
    %v22 = vlaneseq
    %v23 = vshrl.u32 %v22, 7
    %v24 = vsub.s32 0, %v23
    %v25 = vrot.slane %v16, %v24
    %v26 = vmul.f32 %v20, %v25
    %v27 = vld [vmem:[%s1 + $0x1] sm:$0x1]
    %28 = vset.pattern.permute.xlu0 1
    %29 = vperm.xlu0 %28, %v15
    %v30 = vpop.permute.xlu0 %29
    %v32 = vlaneseq
    %v33 = vshrl.u32 %v32, 7
    %v34 = vsub.s32 0, %v33
    %v35 = vrot.slane %v27, %v34
    %v36 = vmul.f32 %v30, %v35
    %v37 = vadd.f32 %v26, %v36
    %v38 = vld [vmem:[%s1 + $0x2] sm:$0x1]
    %39 = vset.pattern.permute.xlu0 2
    %40 = vperm.xlu0 %39, %v15
    %v41 = vpop.permute.xlu0 %40
    %v43 = vlaneseq
    %v44 = vshrl.u32 %v43, 7
    %v45 = vsub.s32 0, %v44
    %v46 = vrot.slane %v38, %v45
    %v47 = vmul.f32 %v41, %v46
    %v48 = vadd.f32 %v37, %v47
    %v49 = vld [vmem:[%s1 + $0x3] sm:$0x1]
    %50 = vset.pattern.permute.xlu0 3
    %51 = vperm.xlu0 %50, %v15
    %v52 = vpop.permute.xlu0 %51
    %v54 = vlaneseq
    %v55 = vshrl.u32 %v54, 7
    %v56 = vsub.s32 0, %v55
    %v57 = vrot.slane %v49, %v56
    %v58 = vmul.f32 %v52, %v57
    %v59 = vadd.f32 %v48, %v58
    %v60 = vld [vmem:[%s1 + $0x4] sm:$0x1]
    %v61 = vlaneseq
    %v62 = vshrl.u32 %v61, 7
    %v63 = vsub.s32 0, %v62
    %v64 = vrot.slane %v60, %v63
    %v65 = vadd.f32 %v59, %v64
    %v66 = vtanh.pop %v65
    %v67 = vld [vmem:[%s2] sm:$0xff]
    %v68 = vld [vmem:[%s2 + $0x8] sm:$0xff]
    %v69 = vld [vmem:[%s2 + $0x10] sm:$0xff]
    %v70 = vld [vmem:[%s2 + $0x18] sm:$0xff]
    %v71 = vld [vmem:[%s2 + $0x20] sm:$0xff]
    %v72 = vld [vmem:[%s2 + $0x28] sm:$0xff]
    %v73 = vld [vmem:[%s2 + $0x30] sm:$0xff]
    %v74 = vld [vmem:[%s2 + $0x38] sm:$0xff]
    %v75 = vld [vmem:[%s2 + $0x40] sm:$0xff]
    %v76 = vld [vmem:[%s2 + $0x48] sm:$0xff]
    %v77 = vld [vmem:[%s2 + $0x50] sm:$0xff]
    %v78 = vld [vmem:[%s2 + $0x58] sm:$0xff]
    %v79 = vld [vmem:[%s2 + $0x60] sm:$0xff]
    %v80 = vld [vmem:[%s2 + $0x68] sm:$0xff]
    %v81 = vld [vmem:[%s2 + $0x70] sm:$0xff]
    %v82 = vld [vmem:[%s2 + $0x78] sm:$0xff]
    %v83 = vld [vmem:[%s2 + $0x80] sm:$0x1]
    %v84 = vlaneseq
    %v85 = vshrl.u32 %v84, 7
    %v86 = vsub.s32 0, %v85
    %v87 = vrot.slane %v83, %v86
    %88 = vmatprep.subr.mxu0 0.0
    %89 = vmatpush1.msra.mxu0 %v82
    %90 = vmatprep.subr.mxu0 0.0
    %91 = vmatpush1.msra.mxu0 %v81
    %92 = vmatprep.subr.mxu0 0.0
    %93 = vmatpush1.msra.mxu0 %v80
    %94 = vmatprep.subr.mxu0 0.0
    %95 = vmatpush1.msra.mxu0 %v79
    %96 = vmatprep.subr.mxu0 0.0
    %97 = vmatpush1.msra.mxu0 %v78
    %98 = vmatprep.subr.mxu0 0.0
    %99 = vmatpush1.msra.mxu0 %v77
    %100 = vmatprep.subr.mxu0 0.0
    %101 = vmatpush1.msra.mxu0 %v76
    %102 = vmatprep.subr.mxu0 0.0
    %103 = vmatpush1.msra.mxu0 %v75
    %104 = vmatprep.subr.mxu0 0.0
    %105 = vmatpush1.msra.mxu0 %v74
    %106 = vmatprep.subr.mxu0 0.0
    %107 = vmatpush1.msra.mxu0 %v73
    %108 = vmatprep.subr.mxu0 0.0
    %109 = vmatpush1.msra.mxu0 %v72
    %110 = vmatprep.subr.mxu0 0.0
    %111 = vmatpush1.msra.mxu0 %v71
    %112 = vmatprep.subr.mxu0 0.0
    %113 = vmatpush1.msra.mxu0 %v70
    %114 = vmatprep.subr.mxu0 0.0
    %115 = vmatpush1.msra.mxu0 %v69
    %116 = vmatprep.subr.mxu0 0.0
    %117 = vmatpush1.msra.mxu0 %v68
    %118 = vmatprep.subr.mxu0 0.0
    %119 = vmatpush1.msra.mxu0 %v67
    %120 = vmatprep.subr.mxu0 0.0
    %121 = vmatpush2.msra.mxu0 0.0
    %122 = vmatprep.subr.mxu0 0.0
    %123 = vmatpush2.msra.mxu0 0.0
    %124 = vmatprep.subr.mxu0 0.0
    %125 = vmatpush2.msra.mxu0 0.0
    %126 = vmatprep.subr.mxu0 0.0
    %127 = vmatpush2.msra.mxu0 0.0
    %128 = vmatprep.subr.mxu0 0.0
    %129 = vmatpush2.msra.mxu0 0.0
    %130 = vmatprep.subr.mxu0 0.0
    %131 = vmatpush2.msra.mxu0 0.0
    %132 = vmatprep.subr.mxu0 0.0
    %133 = vmatpush2.msra.mxu0 0.0
    %134 = vmatprep.subr.mxu0 0.0
    %135 = vmatpush2.msra.mxu0 0.0
    %136 = vmatprep.subr.mxu0 0.0
    %137 = vmatpush2.msra.mxu0 0.0
    %138 = vmatprep.subr.mxu0 0.0
    %139 = vmatpush2.msra.mxu0 0.0
    %140 = vmatprep.subr.mxu0 0.0
    %141 = vmatpush2.msra.mxu0 0.0
    %142 = vmatprep.subr.mxu0 0.0
    %143 = vmatpush2.msra.mxu0 0.0
    %144 = vmatprep.subr.mxu0 0.0
    %145 = vmatpush2.msra.mxu0 0.0
    %146 = vmatprep.subr.mxu0 0.0
    %147 = vmatpush2.msra.mxu0 0.0
    %148 = vmatprep.subr.mxu0 0.0
    %149 = vmatpush2.msra.mxu0 0.0
    %150 = vmatprep.subr.mxu0 0.0
    %151 = vmatpush2.msra.mxu0 0.0
    %152 = vmatprep.mubr.f32.mxu0 0.0
    %153 = vmatmul.mubr.f32.gmra.mxu0 %v66
    %v154 = vpop.f32.mrf.mxu0
    %v155 = vadd.f32 %v87, %v154
    %v156 = vpop.f32.mrf.mxu0
    %157 = vdwg.mxu0
    %vm158 = vcmask 39936
    %v159 = vsel %vm158, %v155, -inf
    %160 = vmax.xlane.f32.xlu0 %v159
    %v161 = vpop.xlane.xlu0 %160
    %v162 = vsub.f32 %v155, %v161
    %v163 = vmul.f32 %v162, 1.442695
    %v164 = vpow.pop %v163
    %v165 = vsel %vm158, %v164, 0.0
    %166 = vadd.xlane.f32.xlu0 %v165
    %v167 = vpop.xlane.xlu0 %166
    %v168 = vrcp.pop %v167
    %v169 = vmul.f32 %v164, %v168
    %170 = vst.msk [vmem:[#allocation2] sm:$0xff] %vm158, %v169
    // Predicated region
    $region14: #{tpu_custom_call.1} parent=1 // pred_check
      _
    $region15: #{tpu_custom_call.1} parent=1 // pred_check_branch
      %172 = sbr.rel (0) target = $region17
    $region16: #{tpu_custom_call.1} parent=1 // pred_region
      %s174 = ssub.s32 128, 128
      %175 = vsyncadd [#allocation3], %s174
      %s177 = sshll.u32 [#allocation2], 4
      %s178 = int_to_ptr.vmem [resolvable:$true] %s177
      %180 = dma.vmem_to_hbm [thread:$0]  %s178, 128, %s3, [#allocation3]
    $region17: #{tpu_custom_call.1} parent=1 // pred_fallthru
      _
    // Predicated region
    $region18: #{tpu_custom_call.1} parent=1 // pred_check
      _
    $region19: #{tpu_custom_call.1} parent=1 // pred_check_branch
      %182 = sbr.rel (0) target = $region21
    $region20: #{tpu_custom_call.1} parent=1 // pred_region
      %183 = dma.done [#allocation3], 128
    $region21: #{tpu_custom_call.1} parent=1 // pred_fallthru
      _
    %184 = vsyncpa [#allocation3], 1

</llo_original>
